<compile_context>
chip_gen: v7x
topology: tpu7x:2x2x1
jax: 0.10.0
libtpu: 0.0.40
codegen_flags: <defaults>
</compile_context>

<pallas_src>
import functools

import jax
import jax.numpy as jnp
from jax.experimental import pallas as pl
from jax.experimental.pallas import tpu as pltpu


def _round_up(x, m):
    return (x + m - 1) // m * m


def _fea_encoder_kernel(x_ref, w0_ref, b0_ref, wmv_ref, bmv_ref, out_ref, *, z_dim):
    x = x_ref[...]                                                  # [tm, in_pad]

    # h = relu(x @ W0 + b0)
    h = jnp.dot(x, w0_ref[...], preferred_element_type=jnp.float32) + b0_ref[...]
    h = jnp.maximum(h, 0.0)
    # TODO(synk): nn.Dropout(p=0.5) training-mode mask (pltpu.prng_random_bits)
    # intentionally omitted; eval mode is identity.

    # Fused projection: one lane-dense matmul producing [z_mean | z_var_pre | 0...].
    y = jnp.dot(h, wmv_ref[...], preferred_element_type=jnp.float32) + bmv_ref[...]

    col = jax.lax.broadcasted_iota(jnp.int32, y.shape, 1)
    mean_mask = col < z_dim
    var_mask = col == z_dim

    # L2 normalize the mean columns: rsqrt-multiply (EUP + VPU), XLU lane-sum.
    sq = jnp.where(mean_mask, y * y, 0.0)
    inv_norm = jax.lax.rsqrt(jnp.sum(sq, axis=-1, keepdims=True))
    zm = y * inv_norm

    # Stable single-evaluation softplus for the var column, then +1.
    zv = jnp.maximum(y, 0.0) + jnp.log1p(jnp.exp(-jnp.abs(y))) + 1.0

    out_ref[...] = jnp.where(mean_mask, zm, jnp.where(var_mask, zv, 0.0))


def fea_encoder_forward(x, w_e0, b_e0, w_mean, b_mean, w_var, b_var, *, tm=256):
    """Forward pass of fea_encoder.

    x:      [in_dim, N]   (same layout as the PyTorch module; transposed here)
    w_e0:   [h_dim, in_dim],  b_e0:   [h_dim]
    w_mean: [z_dim, h_dim],   b_mean: [z_dim]
    w_var:  [1, h_dim],       b_var:  [1]
    Returns (z_mean [N, z_dim], z_var [N, 1]) in float32.
    """
    in_dim, n = x.shape
    h_dim = w_e0.shape[0]
    z_dim = w_mean.shape[0]

    lane = 128
    in_pad = _round_up(in_dim, lane)
    h_pad = _round_up(h_dim, lane)
    out_pad = _round_up(z_dim + 1, lane)

    tm = _round_up(min(tm, _round_up(n, 8)), 8)
    n_pad = _round_up(n, tm)

    f32 = jnp.float32
    # Wrapper-side layout plumbing: transpose + zero-pad everything to lane
    # multiples so all kernel blocks are (8,128)-clean and stores are unmasked.
    x_t = jnp.zeros((n_pad, in_pad), f32).at[:n, :in_dim].set(x.T.astype(f32))
    w0 = jnp.zeros((in_pad, h_pad), f32).at[:in_dim, :h_dim].set(w_e0.T.astype(f32))
    b0 = jnp.zeros((1, h_pad), f32).at[0, :h_dim].set(b_e0.astype(f32))
    wmv = jnp.zeros((h_pad, out_pad), f32)
    wmv = wmv.at[:h_dim, :z_dim].set(w_mean.T.astype(f32))
    wmv = wmv.at[:h_dim, z_dim:z_dim + 1].set(w_var.T.astype(f32))
    bmv = jnp.zeros((1, out_pad), f32)
    bmv = bmv.at[0, :z_dim].set(b_mean.astype(f32))
    bmv = bmv.at[0, z_dim].set(b_var[0].astype(f32))

    grid = (n_pad // tm,)
    cost = pl.CostEstimate(
        flops=2 * n * (in_dim * h_dim + h_dim * (z_dim + 1)),
        transcendentals=3 * n,
        bytes_accessed=4 * (n_pad * in_pad + n_pad * out_pad
                            + in_pad * h_pad + h_pad * out_pad + h_pad + out_pad),
    )

    out = pl.pallas_call(
        functools.partial(_fea_encoder_kernel, z_dim=z_dim),
        out_shape=jax.ShapeDtypeStruct((n_pad, out_pad), f32),
        grid=grid,
        in_specs=[
            pl.BlockSpec((tm, in_pad), lambda i: (i, 0)),      # x rows (tiled)
            pl.BlockSpec((in_pad, h_pad), lambda i: (0, 0)),   # W0 (resident)
            pl.BlockSpec((1, h_pad), lambda i: (0, 0)),        # b0
            pl.BlockSpec((h_pad, out_pad), lambda i: (0, 0)),  # fused W_mean|W_var
            pl.BlockSpec((1, out_pad), lambda i: (0, 0)),      # fused bias
        ],
        out_specs=pl.BlockSpec((tm, out_pad), lambda i: (i, 0)),
        compiler_params=pltpu.CompilerParams(
            dimension_semantics=("parallel",),
            vmem_limit_bytes=32 << 20,
        ),
        cost_estimate=cost,
    )(x_t, w0, b0, wmv, bmv)

    z_mean = out[:n, :z_dim]
    z_var = out[:n, z_dim:z_dim + 1]
    return z_mean, z_var


if __name__ == "__main__":
    in_dim, h_dim, z_dim = 8, 32, 16
    n = 96  # number of samples; module input x is [in_dim, n]

    key = jax.random.PRNGKey(0)
    kx, kw0, kb0, kwm, kbm, kwv, kbv = jax.random.split(key, 7)

    x = jax.random.normal(kx, (in_dim, n), jnp.float32)

    def xavier(k, fan_out, fan_in):
        bound = (6.0 / (fan_in + fan_out)) ** 0.5
        return jax.random.uniform(k, (fan_out, fan_in), jnp.float32, -bound, bound)

    def linear_bias(k, fan_out, fan_in):
        bound = 1.0 / (fan_in ** 0.5)
        return jax.random.uniform(k, (fan_out,), jnp.float32, -bound, bound)

    w_e0 = xavier(kw0, h_dim, in_dim)
    b_e0 = linear_bias(kb0, h_dim, in_dim)
    w_mean = xavier(kwm, z_dim, h_dim)
    b_mean = linear_bias(kbm, z_dim, h_dim)
    w_var = xavier(kwv, 1, h_dim)
    b_var = linear_bias(kbv, 1, h_dim)

    z_mean, z_var = fea_encoder_forward(
        x, w_e0, b_e0, w_mean, b_mean, w_var, b_var, tm=32)
    jax.block_until_ready((z_mean, z_var))

    # Pure-JAX reference (eval-mode dropout = identity).
    x_t = x.T
    h_ref = jnp.maximum(x_t @ w_e0.T + b_e0, 0.0)
    zm_ref = h_ref @ w_mean.T + b_mean
    zm_ref = zm_ref / jnp.linalg.norm(zm_ref, axis=-1, keepdims=True)
    zv_ref = jax.nn.softplus(h_ref @ w_var.T + b_var) + 1.0

    assert z_mean.shape == (n, z_dim) and z_var.shape == (n, 1)
    assert jnp.allclose(z_mean, zm_ref, atol=1e-5, rtol=1e-5)
    assert jnp.allclose(z_var, zv_ref, atol=1e-5, rtol=1e-5)

    print("KERNEL_OK")
</pallas_src>

<mosaic_0001>
module attributes {stable_mosaic.version = 11 : i64} {
  func.func @_fea_encoder_kernel(%arg0: i32, %arg1: memref<32x128xf32, #tpu.memory_space<vmem>>, %arg2: memref<128x128xf32, #tpu.memory_space<vmem>>, %arg3: memref<1x128xf32, #tpu.memory_space<vmem>>, %arg4: memref<128x128xf32, #tpu.memory_space<vmem>>, %arg5: memref<1x128xf32, #tpu.memory_space<vmem>>, %arg6: memref<32x128xf32, #tpu.memory_space<vmem>>) attributes {dimension_semantics = [#tpu.dimension_semantics<parallel>], iteration_bounds = array<i64: 3>, scalar_prefetch = 0 : i64, scratch_operands = 0 : i64, tpu.core_type = #tpu.core_type<tc>, window_params = [{transform_indices = @transform_0, window_bounds = array<i64: 32, 128>}, {pipeline_mode = #tpu.pipeline_mode<synchronous>, transform_indices = @transform_1, window_bounds = array<i64: 128, 128>}, {pipeline_mode = #tpu.pipeline_mode<synchronous>, transform_indices = @transform_2, window_bounds = array<i64: 1, 128>}, {pipeline_mode = #tpu.pipeline_mode<synchronous>, transform_indices = @transform_3, window_bounds = array<i64: 128, 128>}, {pipeline_mode = #tpu.pipeline_mode<synchronous>, transform_indices = @transform_4, window_bounds = array<i64: 1, 128>}, {transform_indices = @transform_5, window_bounds = array<i64: 32, 128>}]} {
    %c0 = arith.constant 0 : index
    %c0_0 = arith.constant 0 : index
    %0 = vector.load %arg1[%c0, %c0_0] : memref<32x128xf32, #tpu.memory_space<vmem>>, vector<32x128xf32>
    %c0_1 = arith.constant 0 : index
    %c0_2 = arith.constant 0 : index
    %1 = vector.load %arg2[%c0_1, %c0_2] : memref<128x128xf32, #tpu.memory_space<vmem>>, vector<128x128xf32>
    %cst = arith.constant dense<0.000000e+00> : vector<32x128xf32>
    %2 = tpu.matmul %0, %1, %cst {dimension_numbers = #tpu.dot_dimension_numbers<[1], [0], [0], [1], [0, 0, 1, 1], [], []>} : vector<32x128xf32>, vector<128x128xf32>, vector<32x128xf32> -> vector<32x128xf32>
    %c0_3 = arith.constant 0 : index
    %c0_4 = arith.constant 0 : index
    %3 = vector.load %arg3[%c0_3, %c0_4] : memref<1x128xf32, #tpu.memory_space<vmem>>, vector<1x128xf32>
    %4 = vector.broadcast %3 : vector<1x128xf32> to vector<32x128xf32>
    %5 = arith.addf %2, %4 : vector<32x128xf32>
    %cst_5 = arith.constant 0.000000e+00 : f32
    %6 = vector.broadcast %cst_5 : f32 to vector<32x128xf32>
    %7 = arith.maximumf %5, %6 : vector<32x128xf32>
    %c0_6 = arith.constant 0 : index
    %c0_7 = arith.constant 0 : index
    %8 = vector.load %arg4[%c0_6, %c0_7] : memref<128x128xf32, #tpu.memory_space<vmem>>, vector<128x128xf32>
    %cst_8 = arith.constant dense<0.000000e+00> : vector<32x128xf32>
    %9 = tpu.matmul %7, %8, %cst_8 {dimension_numbers = #tpu.dot_dimension_numbers<[1], [0], [0], [1], [0, 0, 1, 1], [], []>} : vector<32x128xf32>, vector<128x128xf32>, vector<32x128xf32> -> vector<32x128xf32>
    %c0_9 = arith.constant 0 : index
    %c0_10 = arith.constant 0 : index
    %10 = vector.load %arg5[%c0_9, %c0_10] : memref<1x128xf32, #tpu.memory_space<vmem>>, vector<1x128xf32>
    %11 = vector.broadcast %10 : vector<1x128xf32> to vector<32x128xf32>
    %12 = arith.addf %9, %11 : vector<32x128xf32>
    %13 = tpu.iota {dimensions = array<i32: 1>} : vector<32x128xi32>
    %c16_i32 = arith.constant 16 : i32
    %14 = vector.broadcast %c16_i32 : i32 to vector<32x128xi32>
    %15 = arith.cmpi slt, %13, %14 : vector<32x128xi32>
    %c16_i32_11 = arith.constant 16 : i32
    %16 = vector.broadcast %c16_i32_11 : i32 to vector<32x128xi32>
    %17 = arith.cmpi eq, %13, %16 : vector<32x128xi32>
    %18 = arith.mulf %12, %12 : vector<32x128xf32>
    %cst_12 = arith.constant 0.000000e+00 : f32
    %19 = vector.broadcast %cst_12 : f32 to vector<32x128xf32>
    %20 = arith.select %15, %18, %19 : vector<32x128xi1>, vector<32x128xf32>
    %cst_13 = arith.constant dense<0.000000e+00> : vector<32xf32>
    %21 = vector.multi_reduction <add>, %20, %cst_13 [1] : vector<32x128xf32> to vector<32xf32>
    %22 = vector.shape_cast %21 : vector<32xf32> to vector<32x1xf32>
    %23 = math.rsqrt %22 : vector<32x1xf32>
    %24 = vector.broadcast %23 : vector<32x1xf32> to vector<32x128xf32>
    %25 = arith.mulf %12, %24 : vector<32x128xf32>
    %cst_14 = arith.constant 0.000000e+00 : f32
    %26 = vector.broadcast %cst_14 : f32 to vector<32x128xf32>
    %27 = arith.maximumf %12, %26 : vector<32x128xf32>
    %28 = math.absf %12 : vector<32x128xf32>
    %cst_15 = arith.constant 0.000000e+00 : f32
    %29 = vector.broadcast %cst_15 : f32 to vector<32x128xf32>
    %30 = arith.subf %29, %28 : vector<32x128xf32>
    %31 = math.exp %30 : vector<32x128xf32>
    %32 = math.log1p %31 : vector<32x128xf32>
    %33 = arith.addf %27, %32 : vector<32x128xf32>
    %cst_16 = arith.constant 1.000000e+00 : f32
    %34 = vector.broadcast %cst_16 : f32 to vector<32x128xf32>
    %35 = arith.addf %33, %34 : vector<32x128xf32>
    %cst_17 = arith.constant 0.000000e+00 : f32
    %36 = vector.broadcast %cst_17 : f32 to vector<32x128xf32>
    %37 = arith.select %17, %35, %36 : vector<32x128xi1>, vector<32x128xf32>
    %38 = arith.select %15, %25, %37 : vector<32x128xi1>, vector<32x128xf32>
    %c0_18 = arith.constant 0 : index
    %c0_19 = arith.constant 0 : index
    %39 = vector.load %arg6[%c0_18, %c0_19] : memref<32x128xf32, #tpu.memory_space<vmem>>, vector<32x128xf32>
    tpu.vector_store %arg6[%c0_18, %c0_19], %38 {strides = array<i32>} : memref<32x128xf32, #tpu.memory_space<vmem>>, vector<32x128xf32>,
    return
  }
  func.func @transform_0(%arg0: i32) -> (i32, i32) {
    %c0_i32 = arith.constant 0 : i32
    %c0_i32_0 = arith.constant 0 : i32
    return %arg0, %c0_i32 : i32, i32
  }
  func.func @transform_1(%arg0: i32) -> (i32, i32) {
    %c0_i32 = arith.constant 0 : i32
    %c0_i32_0 = arith.constant 0 : i32
    %c0_i32_1 = arith.constant 0 : i32
    return %c0_i32, %c0_i32_0 : i32, i32
  }
  func.func @transform_2(%arg0: i32) -> (i32, i32) {
    %c0_i32 = arith.constant 0 : i32
    %c0_i32_0 = arith.constant 0 : i32
    %c0_i32_1 = arith.constant 0 : i32
    return %c0_i32, %c0_i32_0 : i32, i32
  }
  func.func @transform_3(%arg0: i32) -> (i32, i32) {
    %c0_i32 = arith.constant 0 : i32
    %c0_i32_0 = arith.constant 0 : i32
    %c0_i32_1 = arith.constant 0 : i32
    return %c0_i32, %c0_i32_0 : i32, i32
  }
  func.func @transform_4(%arg0: i32) -> (i32, i32) {
    %c0_i32 = arith.constant 0 : i32
    %c0_i32_0 = arith.constant 0 : i32
    %c0_i32_1 = arith.constant 0 : i32
    return %c0_i32, %c0_i32_0 : i32, i32
  }
  func.func @transform_5(%arg0: i32) -> (i32, i32) {
    %c0_i32 = arith.constant 0 : i32
    %c0_i32_0 = arith.constant 0 : i32
    return %arg0, %c0_i32 : i32, i32
  }
}

</mosaic_0001>

<llo_original>
// kernel: tpu_custom_call.1
$region0: #{tpu_custom_call.1}
  #allocation0 [shape = 'u32[]', space=smem, size = 0x4, offset = 0x4, fixed_abs, tag = 'smem constant byte address 0x4 - core index']
  #allocation1 [shape = 'u32[144,128]{1,0:T(1,128)}', space=vmem, size = 0x12000, scoped, tag = 'internal scratch']
  %s0 = inlined_call_operand.hbm [shape: f32[96,128], index: 0, kind: input, shape index: {}]
  %s1 = inlined_call_operand.hbm [shape: f32[128,128], index: 1, kind: input, shape index: {}]
  %s2 = inlined_call_operand.vmem [shape: f32[1,128], index: 2, kind: input, shape index: {}]
  %s3 = inlined_call_operand.hbm [shape: f32[128,128], index: 3, kind: input, shape index: {}]
  %s4 = inlined_call_operand.vmem [shape: f32[1,128], index: 4, kind: input, shape index: {}]
  %s5 = inlined_call_operand.hbm [shape: f32[96,128], index: 5, kind: output, shape index: {}]
  %s6 = sld [smem:[#allocation0]]
  $region65: #{tpu_custom_call.1} parent=0
    _
  %s8 = ssub.s32 1, %s6
  %s9 = scalar_select 0, %s8, %s6
  $region1: #{tpu_custom_call.1} parent=0
    #allocation2 [shape = 'u8[32768]{0}', space=vmem, size = 0x8000, scoped, tag = 'input window, operand 0']
    #allocation3 [shape = 's32[2]{0}', space=sflag, size = 0x8, scoped, tag = 'scoped memory for tpu_custom_call.1']
    #allocation4 [shape = 's32[2]{0}', space=sflag, size = 0x8, scoped, tag = 'scoped memory for tpu_custom_call.1']
    #allocation5 [shape = 'u8[65536]{0}', space=vmem, size = 0x10000, scoped, tag = 'input window, operand 1, single buffered']
    #allocation6 [shape = 's32[1]{0}', space=sflag, size = 0x4, scoped, tag = 'scoped memory for tpu_custom_call.1']
    #allocation7 [shape = 'u8[65536]{0}', space=vmem, size = 0x10000, scoped, tag = 'input window, operand 3, single buffered']
    #allocation8 [shape = 'u8[32768]{0}', space=vmem, size = 0x8000, scoped, tag = 'output window, operand 0']
    %10 = vsyncpa [#allocation3], 0
    %s11 = scalar_lea.sflag [#allocation3], 1
    %12 = vsyncpa %s11, 0
    %13 = vsyncpa [#allocation6], 0
    %14 = vsyncpa [#allocation4], 0
    %s15 = scalar_lea.sflag [#allocation4], 1
    %16 = vsyncpa %s15, 0
    loop: start=0, step=1, limit=5
    $region2: #{tpu_custom_call.1} parent=1 // loop_pre_header
      _
    $region3: #{tpu_custom_call.1} parent=1 // loop_header
      %s18 = sphi 0, %s22
      %p19 = scmp.ge.s32.totalorder %s18, 5
      %s28 = sphi 0, %s30
      %s31 = sphi 0, %s28
      %s32 = sphi 0, %s31
      %s48 = sphi 0, %s32
      %s52 = sphi 0, %s52
      %s54 = sphi 0, %s52
      %s55 = sphi 0, %s54
      %s69 = sphi 0, %s55
      %s73 = sphi 0, %s73
      %s75 = sphi 0, %s73
      %s76 = sphi 0, %s75
      %s90 = sphi 0, %s76
      %s94 = sphi 0, %s94
      %s96 = sphi 0, %s94
      %s97 = sphi 0, %s96
      %s111 = sphi 0, %s97
      %s115 = sphi 0, %s115
      %s117 = sphi 0, %s115
      %s118 = sphi 0, %s117
      %s132 = sphi 0, %s118
      %s138 = sphi 0, %s140
      %s141 = sphi 0, %s138
      %s142 = sphi 0, %s141
      %s158 = sphi 0, %s142
    $region4: #{tpu_custom_call.1} parent=1 // loop_header_branch
      %21 = sbr.rel (%p19) target = $region8
    $region5: #{tpu_custom_call.1} parent=1 // loop_body
      %s23 = ssub.s32 %s18, 1
      %s24 = ssub.s32 %s18, 2
      %s25 = sadd.s32 %s18, 1
      %s26 = ssub.s32 %s18, %s25
      %p27 = scmp.eq.s32.totalorder %s26, 0
      %s29 = sadd.s32 %s28, 1
      %s30 = scalar_select %p27, %s28, %s29
      %p33 = pneg %p27
      %p34 = scmp.eq.s32.totalorder %s18, 2
      %p35 = por %p33, %p34
      %p36 = scmp.ne.s32.totalorder %s28, %s31
      %p37 = scmp.eq.s32.totalorder %s18, 0
      %p38 = por %p36, %p37
      %p39 = scmp.ne.s32.totalorder %s28, %s31
      %p40 = scmp.eq.s32.totalorder %s23, 2
      %p41 = por %p39, %p40
      %p42 = scmp.ne.s32.totalorder %s31, %s32
      %p43 = scmp.eq.s32.totalorder %s23, 0
      %p44 = por %p42, %p43
      %p45 = scmp.ne.s32.totalorder %s31, %s32
      %p46 = scmp.eq.s32.totalorder %s24, 2
      %p47 = por %p45, %p46
      %p49 = scmp.ne.s32.totalorder %s32, %s48
      %p50 = scmp.eq.s32.totalorder %s24, 0
      %p51 = por %p49, %p50
      %s53 = sadd.s32 %s52, 1
      %p56 = scmp.eq.s32.totalorder %s18, 2
      %p57 = scmp.ne.s32.totalorder %s52, %s54
      %p58 = scmp.eq.s32.totalorder %s18, 0
      %p59 = por %p57, %p58
      %p60 = scmp.ne.s32.totalorder %s52, %s54
      %p61 = scmp.eq.s32.totalorder %s23, 2
      %p62 = por %p60, %p61
      %p63 = scmp.ne.s32.totalorder %s54, %s55
      %p64 = scmp.eq.s32.totalorder %s23, 0
      %p65 = por %p63, %p64
      %p66 = scmp.ne.s32.totalorder %s54, %s55
      %p67 = scmp.eq.s32.totalorder %s24, 2
      %p68 = por %p66, %p67
      %p70 = scmp.ne.s32.totalorder %s55, %s69
      %p71 = scmp.eq.s32.totalorder %s24, 0
      %p72 = por %p70, %p71
      %s74 = sadd.s32 %s73, 1
      %p77 = scmp.eq.s32.totalorder %s18, 2
      %p78 = scmp.ne.s32.totalorder %s73, %s75
      %p79 = scmp.eq.s32.totalorder %s18, 0
      %p80 = por %p78, %p79
      %p81 = scmp.ne.s32.totalorder %s73, %s75
      %p82 = scmp.eq.s32.totalorder %s23, 2
      %p83 = por %p81, %p82
      %p84 = scmp.ne.s32.totalorder %s75, %s76
      %p85 = scmp.eq.s32.totalorder %s23, 0
      %p86 = por %p84, %p85
      %p87 = scmp.ne.s32.totalorder %s75, %s76
      %p88 = scmp.eq.s32.totalorder %s24, 2
      %p89 = por %p87, %p88
      %p91 = scmp.ne.s32.totalorder %s76, %s90
      %p92 = scmp.eq.s32.totalorder %s24, 0
      %p93 = por %p91, %p92
      %s95 = sadd.s32 %s94, 1
      %p98 = scmp.eq.s32.totalorder %s18, 2
      %p99 = scmp.ne.s32.totalorder %s94, %s96
      %p100 = scmp.eq.s32.totalorder %s18, 0
      %p101 = por %p99, %p100
      %p102 = scmp.ne.s32.totalorder %s94, %s96
      %p103 = scmp.eq.s32.totalorder %s23, 2
      %p104 = por %p102, %p103
      %p105 = scmp.ne.s32.totalorder %s96, %s97
      %p106 = scmp.eq.s32.totalorder %s23, 0
      %p107 = por %p105, %p106
      %p108 = scmp.ne.s32.totalorder %s96, %s97
      %p109 = scmp.eq.s32.totalorder %s24, 2
      %p110 = por %p108, %p109
      %p112 = scmp.ne.s32.totalorder %s97, %s111
      %p113 = scmp.eq.s32.totalorder %s24, 0
      %p114 = por %p112, %p113
      %s116 = sadd.s32 %s115, 1
      %p119 = scmp.eq.s32.totalorder %s18, 2
      %p120 = scmp.ne.s32.totalorder %s115, %s117
      %p121 = scmp.eq.s32.totalorder %s18, 0
      %p122 = por %p120, %p121
      %p123 = scmp.ne.s32.totalorder %s115, %s117
      %p124 = scmp.eq.s32.totalorder %s23, 2
      %p125 = por %p123, %p124
      %p126 = scmp.ne.s32.totalorder %s117, %s118
      %p127 = scmp.eq.s32.totalorder %s23, 0
      %p128 = por %p126, %p127
      %p129 = scmp.ne.s32.totalorder %s117, %s118
      %p130 = scmp.eq.s32.totalorder %s24, 2
      %p131 = por %p129, %p130
      %p133 = scmp.ne.s32.totalorder %s118, %s132
      %p134 = scmp.eq.s32.totalorder %s24, 0
      %p135 = por %p133, %p134
      %s136 = ssub.s32 %s18, %s25
      %p137 = scmp.eq.s32.totalorder %s136, 0
      %s139 = sadd.s32 %s138, 1
      %s140 = scalar_select %p137, %s138, %s139
      %p143 = pneg %p137
      %p144 = scmp.eq.s32.totalorder %s18, 2
      %p145 = por %p143, %p144
      %p146 = scmp.ne.s32.totalorder %s138, %s141
      %p147 = scmp.eq.s32.totalorder %s18, 0
      %p148 = por %p146, %p147
      %p149 = scmp.ne.s32.totalorder %s138, %s141
      %p150 = scmp.eq.s32.totalorder %s23, 2
      %p151 = por %p149, %p150
      %p152 = scmp.ne.s32.totalorder %s141, %s142
      %p153 = scmp.eq.s32.totalorder %s23, 0
      %p154 = por %p152, %p153
      %p155 = scmp.ne.s32.totalorder %s141, %s142
      %p156 = scmp.eq.s32.totalorder %s24, 2
      %p157 = por %p155, %p156
      %p159 = scmp.ne.s32.totalorder %s142, %s158
      %p160 = scmp.eq.s32.totalorder %s24, 0
      %p161 = por %p159, %p160
      %p162 = scmp.le.s32.totalorder 1, %s18
      %p163 = scmp.lt.s32.totalorder %s18, 4
      %p164 = pnand %p162, %p163
      %p165 = pneg %p164
      // Predicated region
      $region9: #{tpu_custom_call.1} parent=5 // pred_check
        _
      $region10: #{tpu_custom_call.1} parent=5 // pred_check_branch
        %167 = sbr.rel (%p164) target = $region12
      $region11: #{tpu_custom_call.1} parent=5 // pred_region
        %s168 = ssub.s32 %s18, 1
        // Predicated region
        $region13: #{tpu_custom_call.1} parent=11 // pred_check
          %p169 = pneg %p65
        $region14: #{tpu_custom_call.1} parent=11 // pred_check_branch
          %171 = sbr.rel (%p169) target = $region16
        $region15: #{tpu_custom_call.1} parent=11 // pred_region
          %s173 = ssub.s32 2048, 2048
          %174 = vsyncadd [#allocation6], %s173
          %s175 = sshll.u32 [#allocation5], 4
          %s176 = int_to_ptr.vmem [resolvable:$true] %s175
          %181 = dma.hbm_to_vmem [thread:$0]  %s1, 2048, %s176, [#allocation6], 128, 128, 8
        $region16: #{tpu_custom_call.1} parent=11 // pred_fallthru
          _
        // Predicated region
        $region17: #{tpu_custom_call.1} parent=11 // pred_check
          %p182 = pneg %p86
        $region18: #{tpu_custom_call.1} parent=11 // pred_check_branch
          %184 = sbr.rel (%p182) target = $region20
        $region19: #{tpu_custom_call.1} parent=11 // pred_region
          _
        $region20: #{tpu_custom_call.1} parent=11 // pred_fallthru
          _
        // Predicated region
        $region21: #{tpu_custom_call.1} parent=11 // pred_check
          %p185 = pneg %p107
        $region22: #{tpu_custom_call.1} parent=11 // pred_check_branch
          %187 = sbr.rel (%p185) target = $region24
        $region23: #{tpu_custom_call.1} parent=11 // pred_region
          %s189 = ssub.s32 2048, 2048
          %190 = vsyncadd [#allocation6], %s189
          %s191 = sshll.u32 [#allocation7], 4
          %s192 = int_to_ptr.vmem [resolvable:$true] %s191
          %197 = dma.hbm_to_vmem [thread:$0]  %s3, 2048, %s192, [#allocation6], 128, 128, 8
        $region24: #{tpu_custom_call.1} parent=11 // pred_fallthru
          _
        // Predicated region
        $region25: #{tpu_custom_call.1} parent=11 // pred_check
          %p198 = pneg %p128
        $region26: #{tpu_custom_call.1} parent=11 // pred_check_branch
          %200 = sbr.rel (%p198) target = $region28
        $region27: #{tpu_custom_call.1} parent=11 // pred_region
          _
        $region28: #{tpu_custom_call.1} parent=11 // pred_fallthru
          _
      $region12: #{tpu_custom_call.1} parent=5 // pred_fallthru
        _
      %p201 = scmp.lt.s32.totalorder %s18, 3
      // Predicated region
      $region29: #{tpu_custom_call.1} parent=5 // pred_check
        %p202 = pneg %p201
      $region30: #{tpu_custom_call.1} parent=5 // pred_check_branch
        %204 = sbr.rel (%p202) target = $region32
      $region31: #{tpu_custom_call.1} parent=5 // pred_region
        // Predicated region
        $region33: #{tpu_custom_call.1} parent=31 // pred_check
          %p205 = pneg %p38
        $region34: #{tpu_custom_call.1} parent=31 // pred_check_branch
          %207 = sbr.rel (%p205) target = $region36
        $region35: #{tpu_custom_call.1} parent=31 // pred_region
          %s208 = sand.u32 %s28, 1
          %s209 = scalar_lea.sflag [#allocation3], %s208
          %s210 = sand.u32 %s28, 1
          %s211 = smul.addr %s210, 32
          %s212 = scalar_lea.vmem [#allocation2], %s211
          %s213 = smul.u32 4, %s18
          %s215 = ssub.s32 512, 512
          %216 = vsyncadd %s209, %s215
          %s217 = smul.addr %s213, 128
          %s218 = scalar_lea.hbm %s0, %s217
          %s219 = sshll.u32 %s212, 4
          %s220 = int_to_ptr.vmem [resolvable:$true] %s219
          %225 = dma.hbm_to_vmem [thread:$0]  %s218, 512, %s220, %s209, 128, 128, 8
        $region36: #{tpu_custom_call.1} parent=31 // pred_fallthru
          _
      $region32: #{tpu_custom_call.1} parent=5 // pred_fallthru
        _
      %p226 = scmp.le.s32.totalorder 1, %s18
      %p227 = scmp.lt.s32.totalorder %s18, 4
      %p228 = pnand %p226, %p227
      %p229 = pneg %p228
      // Predicated region
      $region37: #{tpu_custom_call.1} parent=5 // pred_check
        _
      $region38: #{tpu_custom_call.1} parent=5 // pred_check_branch
        %231 = sbr.rel (%p228) target = $region40
      $region39: #{tpu_custom_call.1} parent=5 // pred_region
        %s232 = ssub.s32 %s18, 1
        %s233 = sand.u32 %s31, 1
        %s234 = scalar_lea.sflag [#allocation3], %s233
        %s235 = sand.u32 %s31, 1
        %s236 = smul.addr %s235, 32
        %s237 = scalar_lea.vmem [#allocation2], %s236
        // Predicated region
        $region41: #{tpu_custom_call.1} parent=39 // pred_check
          %p238 = pneg %p44
        $region42: #{tpu_custom_call.1} parent=39 // pred_check_branch
          %240 = sbr.rel (%p238) target = $region44
        $region43: #{tpu_custom_call.1} parent=39 // pred_region
          %241 = dma.done %s234, 512
        $region44: #{tpu_custom_call.1} parent=39 // pred_fallthru
          _
        // Predicated region
        $region45: #{tpu_custom_call.1} parent=39 // pred_check
          %p242 = pneg %p65
        $region46: #{tpu_custom_call.1} parent=39 // pred_check_branch
          %244 = sbr.rel (%p242) target = $region48
        $region47: #{tpu_custom_call.1} parent=39 // pred_region
          %245 = dma.done [#allocation6], 2048
        $region48: #{tpu_custom_call.1} parent=39 // pred_fallthru
          _
        // Predicated region
        $region49: #{tpu_custom_call.1} parent=39 // pred_check
          %p246 = pneg %p107
        $region50: #{tpu_custom_call.1} parent=39 // pred_check_branch
          %248 = sbr.rel (%p246) target = $region52
        $region51: #{tpu_custom_call.1} parent=39 // pred_region
          %249 = dma.done [#allocation6], 2048
        $region52: #{tpu_custom_call.1} parent=39 // pred_fallthru
          _
        %s250 = sand.u32 %s31, 1
        %s251 = scalar_lea.sflag [#allocation3], %s250
        %s252 = sand.u32 %s31, 1
        %s253 = smul.addr %s252, 32
        %s254 = scalar_lea.vmem [#allocation2], %s253
        %p255 = pneg %p44
        %p256 = pneg %p41
        %p257 = pneg %p65
        %p258 = pneg %p62
        %p259 = pneg %p86
        %p260 = pneg %p83
        %p261 = pneg %p107
        %p262 = pneg %p104
        %p263 = pneg %p128
        %p264 = pneg %p125
        %p265 = pneg %p154
        %p266 = pneg %p151
        %s267 = sand.u32 %s141, 1
        %s268 = scalar_lea.sflag [#allocation4], %s267
        %s269 = sand.u32 %s141, 1
        %s270 = smul.addr %s269, 32
        %s271 = scalar_lea.vmem [#allocation8], %s270
        %s272 = smul.u32 4, %s23
        %s273 = smul.u32 4, %s23
        %v274 = vld [vmem:[%s237] sm:$0xff]
        %v275 = vld [vmem:[%s237 + $0x8] sm:$0xff]
        %v276 = vld [vmem:[%s237 + $0x10] sm:$0xff]
        %v277 = vld [vmem:[%s237 + $0x18] sm:$0xff]
        %v278 = vld [vmem:[#allocation5] sm:$0xff]
        %v279 = vld [vmem:[#allocation5 + $0x8] sm:$0xff]
        %v280 = vld [vmem:[#allocation5 + $0x10] sm:$0xff]
        %v281 = vld [vmem:[#allocation5 + $0x18] sm:$0xff]
        %v282 = vld [vmem:[#allocation5 + $0x20] sm:$0xff]
        %v283 = vld [vmem:[#allocation5 + $0x28] sm:$0xff]
        %v284 = vld [vmem:[#allocation5 + $0x30] sm:$0xff]
        %v285 = vld [vmem:[#allocation5 + $0x38] sm:$0xff]
        %v286 = vld [vmem:[#allocation5 + $0x40] sm:$0xff]
        %v287 = vld [vmem:[#allocation5 + $0x48] sm:$0xff]
        %v288 = vld [vmem:[#allocation5 + $0x50] sm:$0xff]
        %v289 = vld [vmem:[#allocation5 + $0x58] sm:$0xff]
        %v290 = vld [vmem:[#allocation5 + $0x60] sm:$0xff]
        %v291 = vld [vmem:[#allocation5 + $0x68] sm:$0xff]
        %v292 = vld [vmem:[#allocation5 + $0x70] sm:$0xff]
        %v293 = vld [vmem:[#allocation5 + $0x78] sm:$0xff]
        %v294 = vld [vmem:[%s2] sm:$0x1]
        %v296 = vlaneseq
        %v297 = vshrl.u32 %v296, 7
        %v298 = vsub.s32 0, %v297
        %v299 = vrot.slane %v294, %v298
        %301 = vmatprep.subr.mxu0 0.0
        %302 = vmatpush1.msra.mxu0 %v278
        %303 = vmatprep.subr.mxu0 0.0
        %304 = vmatpush1.msra.mxu0 %v279
        %305 = vmatprep.subr.mxu0 0.0
        %306 = vmatpush1.msra.mxu0 %v280
        %307 = vmatprep.subr.mxu0 0.0
        %308 = vmatpush1.msra.mxu0 %v281
        %309 = vmatprep.subr.mxu0 0.0
        %310 = vmatpush1.msra.mxu0 %v282
        %311 = vmatprep.subr.mxu0 0.0
        %312 = vmatpush1.msra.mxu0 %v283
        %313 = vmatprep.subr.mxu0 0.0
        %314 = vmatpush1.msra.mxu0 %v284
        %315 = vmatprep.subr.mxu0 0.0
        %316 = vmatpush1.msra.mxu0 %v285
        %317 = vmatprep.subr.mxu0 0.0
        %318 = vmatpush1.msra.mxu0 %v286
        %319 = vmatprep.subr.mxu0 0.0
        %320 = vmatpush1.msra.mxu0 %v287
        %321 = vmatprep.subr.mxu0 0.0
        %322 = vmatpush1.msra.mxu0 %v288
        %323 = vmatprep.subr.mxu0 0.0
        %324 = vmatpush1.msra.mxu0 %v289
        %325 = vmatprep.subr.mxu0 0.0
        %326 = vmatpush1.msra.mxu0 %v290
        %327 = vmatprep.subr.mxu0 0.0
        %328 = vmatpush1.msra.mxu0 %v291
        %329 = vmatprep.subr.mxu0 0.0
        %330 = vmatpush1.msra.mxu0 %v292
        %331 = vmatprep.subr.mxu0 0.0
        %332 = vmatpush1.msra.mxu0 %v293
        %333 = vmatprep.subr.mxu0 0.0
        %334 = vmatpush1.msra.mxu0 0.0
        %335 = vmatprep.subr.mxu0 0.0
        %336 = vmatpush1.msra.mxu0 0.0
        %337 = vmatprep.subr.mxu0 0.0
        %338 = vmatpush1.msra.mxu0 0.0
        %339 = vmatprep.subr.mxu0 0.0
        %340 = vmatpush1.msra.mxu0 0.0
        %341 = vmatprep.subr.mxu0 0.0
        %342 = vmatpush1.msra.mxu0 0.0
        %343 = vmatprep.subr.mxu0 0.0
        %344 = vmatpush1.msra.mxu0 0.0
        %345 = vmatprep.subr.mxu0 0.0
        %346 = vmatpush1.msra.mxu0 0.0
        %347 = vmatprep.subr.mxu0 0.0
        %348 = vmatpush1.msra.mxu0 0.0
        %349 = vmatprep.subr.mxu0 0.0
        %350 = vmatpush1.msra.mxu0 0.0
        %351 = vmatprep.subr.mxu0 0.0
        %352 = vmatpush1.msra.mxu0 0.0
        %353 = vmatprep.subr.mxu0 0.0
        %354 = vmatpush1.msra.mxu0 0.0
        %355 = vmatprep.subr.mxu0 0.0
        %356 = vmatpush1.msra.mxu0 0.0
        %357 = vmatprep.subr.mxu0 0.0
        %358 = vmatpush1.msra.mxu0 0.0
        %359 = vmatprep.subr.mxu0 0.0
        %360 = vmatpush1.msra.mxu0 0.0
        %361 = vmatprep.subr.mxu0 0.0
        %362 = vmatpush1.msra.mxu0 0.0
        %363 = vmatprep.subr.mxu0 0.0
        %364 = vmatpush1.msra.mxu0 0.0
        %365 = vmatprep.mubr.f32.mxu0 0.0
        %366 = vmatmul.mubr.f32.gmra.mrb[0].mxu0 %v274
        %v367 = vpop.f32.mrb[0].mxu0
        %v368 = vadd.f32 %v299, %v367
        %v369 = vpop.f32.mrb[0].mxu0
        %370 = vmatprep.mubr.f32.mxu0 0.0
        %371 = vmatmul.mubr.f32.gmra.mrb[0].mxu0 %v275
        %v372 = vpop.f32.mrb[0].mxu0
        %v373 = vadd.f32 %v299, %v372
        %v374 = vpop.f32.mrb[0].mxu0
        %375 = vmatprep.mubr.f32.mxu0 0.0
        %376 = vmatmul.mubr.f32.gmra.mrb[0].mxu0 %v276
        %v377 = vpop.f32.mrb[0].mxu0
        %v378 = vadd.f32 %v299, %v377
        %v379 = vpop.f32.mrb[0].mxu0
        %380 = vmatprep.mubr.f32.mxu0 0.0
        %381 = vmatmul.mubr.f32.gmra.mrb[0].mxu0 %v277
        %v382 = vpop.f32.mrb[0].mxu0
        %v383 = vadd.f32 %v299, %v382
        %v384 = vpop.f32.mrb[0].mxu0
        %385 = vdwg.mxu0
        %v386 = vmax.f32 %v368, 0.0
        %v387 = vmax.f32 %v373, 0.0
        %v388 = vmax.f32 %v378, 0.0
        %v389 = vmax.f32 %v383, 0.0
        %v390 = vld [vmem:[#allocation7] sm:$0xff]
        %v391 = vld [vmem:[#allocation7 + $0x8] sm:$0xff]
        %v392 = vld [vmem:[#allocation7 + $0x10] sm:$0xff]
        %v393 = vld [vmem:[#allocation7 + $0x18] sm:$0xff]
        %v394 = vld [vmem:[#allocation7 + $0x20] sm:$0xff]
        %v395 = vld [vmem:[#allocation7 + $0x28] sm:$0xff]
        %v396 = vld [vmem:[#allocation7 + $0x30] sm:$0xff]
        %v397 = vld [vmem:[#allocation7 + $0x38] sm:$0xff]
        %v398 = vld [vmem:[#allocation7 + $0x40] sm:$0xff]
        %v399 = vld [vmem:[#allocation7 + $0x48] sm:$0xff]
        %v400 = vld [vmem:[#allocation7 + $0x50] sm:$0xff]
        %v401 = vld [vmem:[#allocation7 + $0x58] sm:$0xff]
        %v402 = vld [vmem:[#allocation7 + $0x60] sm:$0xff]
        %v403 = vld [vmem:[#allocation7 + $0x68] sm:$0xff]
        %v404 = vld [vmem:[#allocation7 + $0x70] sm:$0xff]
        %v405 = vld [vmem:[#allocation7 + $0x78] sm:$0xff]
        %v406 = vld [vmem:[%s4] sm:$0x1]
        %v408 = vlaneseq
        %v409 = vshrl.u32 %v408, 7
        %v410 = vsub.s32 0, %v409
        %v411 = vrot.slane %v406, %v410
        %413 = vmatprep.subr.mxu0 0.0
        %414 = vmatpush1.msra.mxu0 %v390
        %415 = vmatprep.subr.mxu0 0.0
        %416 = vmatpush1.msra.mxu0 %v391
        %417 = vmatprep.subr.mxu0 0.0
        %418 = vmatpush1.msra.mxu0 %v392
        %419 = vmatprep.subr.mxu0 0.0
        %420 = vmatpush1.msra.mxu0 %v393
        %421 = vmatprep.subr.mxu0 0.0
        %422 = vmatpush1.msra.mxu0 %v394
        %423 = vmatprep.subr.mxu0 0.0
        %424 = vmatpush1.msra.mxu0 %v395
        %425 = vmatprep.subr.mxu0 0.0
        %426 = vmatpush1.msra.mxu0 %v396
        %427 = vmatprep.subr.mxu0 0.0
        %428 = vmatpush1.msra.mxu0 %v397
        %429 = vmatprep.subr.mxu0 0.0
        %430 = vmatpush1.msra.mxu0 %v398
        %431 = vmatprep.subr.mxu0 0.0
        %432 = vmatpush1.msra.mxu0 %v399
        %433 = vmatprep.subr.mxu0 0.0
        %434 = vmatpush1.msra.mxu0 %v400
        %435 = vmatprep.subr.mxu0 0.0
        %436 = vmatpush1.msra.mxu0 %v401
        %437 = vmatprep.subr.mxu0 0.0
        %438 = vmatpush1.msra.mxu0 %v402
        %439 = vmatprep.subr.mxu0 0.0
        %440 = vmatpush1.msra.mxu0 %v403
        %441 = vmatprep.subr.mxu0 0.0
        %442 = vmatpush1.msra.mxu0 %v404
        %443 = vmatprep.subr.mxu0 0.0
        %444 = vmatpush1.msra.mxu0 %v405
        %445 = vmatprep.subr.mxu0 0.0
        %446 = vmatpush1.msra.mxu0 0.0
        %447 = vmatprep.subr.mxu0 0.0
        %448 = vmatpush1.msra.mxu0 0.0
        %449 = vmatprep.subr.mxu0 0.0
        %450 = vmatpush1.msra.mxu0 0.0
        %451 = vmatprep.subr.mxu0 0.0
        %452 = vmatpush1.msra.mxu0 0.0
        %453 = vmatprep.subr.mxu0 0.0
        %454 = vmatpush1.msra.mxu0 0.0
        %455 = vmatprep.subr.mxu0 0.0
        %456 = vmatpush1.msra.mxu0 0.0
        %457 = vmatprep.subr.mxu0 0.0
        %458 = vmatpush1.msra.mxu0 0.0
        %459 = vmatprep.subr.mxu0 0.0
        %460 = vmatpush1.msra.mxu0 0.0
        %461 = vmatprep.subr.mxu0 0.0
        %462 = vmatpush1.msra.mxu0 0.0
        %463 = vmatprep.subr.mxu0 0.0
        %464 = vmatpush1.msra.mxu0 0.0
        %465 = vmatprep.subr.mxu0 0.0
        %466 = vmatpush1.msra.mxu0 0.0
        %467 = vmatprep.subr.mxu0 0.0
        %468 = vmatpush1.msra.mxu0 0.0
        %469 = vmatprep.subr.mxu0 0.0
        %470 = vmatpush1.msra.mxu0 0.0
        %471 = vmatprep.subr.mxu0 0.0
        %472 = vmatpush1.msra.mxu0 0.0
        %473 = vmatprep.subr.mxu0 0.0
        %474 = vmatpush1.msra.mxu0 0.0
        %475 = vmatprep.subr.mxu0 0.0
        %476 = vmatpush1.msra.mxu0 0.0
        %477 = vmatprep.mubr.f32.mxu0 0.0
        %478 = vmatmul.mubr.f32.gmra.mrb[0].mxu0 %v386
        %v479 = vpop.f32.mrb[0].mxu0
        %v480 = vadd.f32 %v411, %v479
        %v481 = vpop.f32.mrb[0].mxu0
        %482 = vmatprep.mubr.f32.mxu0 0.0
        %483 = vmatmul.mubr.f32.gmra.mrb[0].mxu0 %v387
        %v484 = vpop.f32.mrb[0].mxu0
        %v485 = vadd.f32 %v411, %v484
        %v486 = vpop.f32.mrb[0].mxu0
        %487 = vmatprep.mubr.f32.mxu0 0.0
        %488 = vmatmul.mubr.f32.gmra.mrb[0].mxu0 %v388
        %v489 = vpop.f32.mrb[0].mxu0
        %v490 = vadd.f32 %v411, %v489
        %v491 = vpop.f32.mrb[0].mxu0
        %492 = vmatprep.mubr.f32.mxu0 0.0
        %493 = vmatmul.mubr.f32.gmra.mrb[0].mxu0 %v389
        %v494 = vpop.f32.mrb[0].mxu0
        %v495 = vadd.f32 %v411, %v494
        %v496 = vpop.f32.mrb[0].mxu0
        %497 = vdwg.mxu0
        %v498 = vlaneseq
        %v499 = vand.u32 %v498, 127
        %vm500 = vcmp.lt.s32.totalorder %v499, 16
        %vm501 = vcmp.eq.s32.totalorder %v499, 16
        %v502 = vmul.f32 %v480, %v480
        %v503 = vmul.f32 %v485, %v485
        %v504 = vmul.f32 %v490, %v490
        %v505 = vmul.f32 %v495, %v495
        %v506 = vsel %vm500, %v502, 0.0
        %v507 = vsel %vm500, %v503, 0.0
        %v508 = vsel %vm500, %v504, 0.0
        %v509 = vsel %vm500, %v505, 0.0
        %510 = vadd.xlane.f32.xlu0 %v506
        %v511 = vpop.xlane.xlu0 %510
        %512 = vadd.xlane.f32.xlu0 %v507
        %v513 = vpop.xlane.xlu0 %512
        %514 = vadd.xlane.f32.xlu0 %v508
        %v515 = vpop.xlane.xlu0 %514
        %516 = vadd.xlane.f32.xlu0 %v509
        %v517 = vpop.xlane.xlu0 %516
        %v518 = vrsqrt.pop %v511
        %v519 = vrsqrt.pop %v513
        %v520 = vrsqrt.pop %v515
        %v521 = vrsqrt.pop %v517
        %v522 = vmul.f32 %v480, %v518
        %v523 = vmul.f32 %v485, %v519
        %v524 = vmul.f32 %v490, %v520
        %v525 = vmul.f32 %v495, %v521
        %v526 = vmax.f32 %v480, 0.0
        %v527 = vmax.f32 %v485, 0.0
        %v528 = vmax.f32 %v490, 0.0
        %v529 = vmax.f32 %v495, 0.0
        %v530 = vand.u32 2147483647, %v480
        %v531 = vand.u32 2147483647, %v485
        %v532 = vand.u32 2147483647, %v490
        %v533 = vand.u32 2147483647, %v495
        %v534 = vsub.f32 0.0, %v530
        %v535 = vsub.f32 0.0, %v531
        %v536 = vsub.f32 0.0, %v532
        %v537 = vsub.f32 0.0, %v533
        %v538 = vmul.f32 %v534, 1.442695
        %v539 = vpow.pop %v538
        %v540 = vmul.f32 %v535, 1.442695
        %v541 = vpow.pop %v540
        %v542 = vmul.f32 %v536, 1.442695
        %v543 = vpow.pop %v542
        %v544 = vmul.f32 %v537, 1.442695
        %v545 = vpow.pop %v544
        %v546 = vadd.f32 %v539, 1.0
        %v547 = vlog2.pop %v546
        %v548 = vmul.f32 %v547, 0.6931472
        %v549 = vmul.f32 -0.5, %v539
        %v550 = vadd.f32 %v549, 1.0
        %v551 = vmul.f32 %v550, %v539
        %v552 = vand.u32 2147483647, %v539
        %vm553 = vcmp.lt.f32.partialorder %v552, 0.0004427343
        %v554 = vsel %vm553, %v551, %v548
        %v555 = vadd.f32 %v541, 1.0
        %v556 = vlog2.pop %v555
        %v557 = vmul.f32 %v556, 0.6931472
        %v558 = vmul.f32 -0.5, %v541
        %v559 = vadd.f32 %v558, 1.0
        %v560 = vmul.f32 %v559, %v541
        %v561 = vand.u32 2147483647, %v541
        %vm562 = vcmp.lt.f32.partialorder %v561, 0.0004427343
        %v563 = vsel %vm562, %v560, %v557
        %v564 = vadd.f32 %v543, 1.0
        %v565 = vlog2.pop %v564
        %v566 = vmul.f32 %v565, 0.6931472
        %v567 = vmul.f32 -0.5, %v543
        %v568 = vadd.f32 %v567, 1.0
        %v569 = vmul.f32 %v568, %v543
        %v570 = vand.u32 2147483647, %v543
        %vm571 = vcmp.lt.f32.partialorder %v570, 0.0004427343
        %v572 = vsel %vm571, %v569, %v566
        %v573 = vadd.f32 %v545, 1.0
        %v574 = vlog2.pop %v573
        %v575 = vmul.f32 %v574, 0.6931472
        %v576 = vmul.f32 -0.5, %v545
        %v577 = vadd.f32 %v576, 1.0
        %v578 = vmul.f32 %v577, %v545
        %v579 = vand.u32 2147483647, %v545
        %vm580 = vcmp.lt.f32.partialorder %v579, 0.0004427343
        %v581 = vsel %vm580, %v578, %v575
        %v582 = vadd.f32 %v526, %v554
        %v583 = vadd.f32 %v527, %v563
        %v584 = vadd.f32 %v528, %v572
        %v585 = vadd.f32 %v529, %v581
        %v586 = vadd.f32 %v582, 1.0
        %v587 = vadd.f32 %v583, 1.0
        %v588 = vadd.f32 %v584, 1.0
        %v589 = vadd.f32 %v585, 1.0
        %v590 = vsel %vm501, %v586, 0.0
        %v591 = vsel %vm501, %v587, 0.0
        %v592 = vsel %vm501, %v588, 0.0
        %v593 = vsel %vm501, %v589, 0.0
        %v594 = vsel %vm500, %v522, %v590
        %v595 = vsel %vm500, %v523, %v591
        %v596 = vsel %vm500, %v524, %v592
        %v597 = vsel %vm500, %v525, %v593
        %598 = vst [vmem:[%s271] sm:$0xff] %v594
        %599 = vst [vmem:[%s271 + $0x8] sm:$0xff] %v595
        %600 = vst [vmem:[%s271 + $0x10] sm:$0xff] %v596
        %601 = vst [vmem:[%s271 + $0x18] sm:$0xff] %v597
        %s602 = sand.u32 %s141, 1
        %s603 = scalar_lea.sflag [#allocation4], %s602
        %s604 = sand.u32 %s141, 1
        %s605 = smul.addr %s604, 32
        %s606 = scalar_lea.vmem [#allocation8], %s605
        // Predicated region
        $region53: #{tpu_custom_call.1} parent=39 // pred_check
          %p607 = pneg %p151
        $region54: #{tpu_custom_call.1} parent=39 // pred_check_branch
          %609 = sbr.rel (%p607) target = $region56
        $region55: #{tpu_custom_call.1} parent=39 // pred_region
          %s610 = smul.u32 4, %s23
          %s612 = ssub.s32 512, 512
          %613 = vsyncadd %s603, %s612
          %s614 = smul.addr %s610, 128
          %s615 = scalar_lea.hbm %s5, %s614
          %s616 = sshll.u32 %s606, 4
          %s617 = int_to_ptr.vmem [resolvable:$true] %s616
          %622 = dma.vmem_to_hbm [thread:$0]  %s617, 512, %s615, %s603, 128, 128, 8
        $region56: #{tpu_custom_call.1} parent=39 // pred_fallthru
          _
      $region40: #{tpu_custom_call.1} parent=5 // pred_fallthru
        _
      %p623 = scmp.le.s32.totalorder 2, %s18
      // Predicated region
      $region57: #{tpu_custom_call.1} parent=5 // pred_check
        %p624 = pneg %p623
      $region58: #{tpu_custom_call.1} parent=5 // pred_check_branch
        %626 = sbr.rel (%p624) target = $region60
      $region59: #{tpu_custom_call.1} parent=5 // pred_region
        %s627 = ssub.s32 %s18, 2
        // Predicated region
        $region61: #{tpu_custom_call.1} parent=59 // pred_check
          %p628 = pneg %p157
        $region62: #{tpu_custom_call.1} parent=59 // pred_check_branch
          %630 = sbr.rel (%p628) target = $region64
        $region63: #{tpu_custom_call.1} parent=59 // pred_region
          %s631 = sand.u32 %s142, 1
          %s632 = scalar_lea.sflag [#allocation4], %s631
          %s633 = sand.u32 %s142, 1
          %s634 = smul.addr %s633, 32
          %s635 = scalar_lea.vmem [#allocation8], %s634
          %636 = dma.done %s632, 512
        $region64: #{tpu_custom_call.1} parent=59 // pred_fallthru
          _
      $region60: #{tpu_custom_call.1} parent=5 // pred_fallthru
        _
    $region6: #{tpu_custom_call.1} parent=1 // loop_footer
      %s22 = sadd.s32 1, %s18
    $region7: #{tpu_custom_call.1} parent=1 // loop_footer_branch
      %17 = sbr.rel target = $region3
    $region8: #{tpu_custom_call.1} parent=1 // loop_exit
      _
    %637 = vsyncpa [#allocation3], 1
    %s638 = scalar_lea.sflag [#allocation3], 1
    %639 = vsyncpa %s638, 1
    %640 = vsyncpa [#allocation6], 1
    %641 = vsyncpa [#allocation4], 1
    %s642 = scalar_lea.sflag [#allocation4], 1
    %643 = vsyncpa %s642, 1

</llo_original>
